<compile_context>
chip_gen: v6e
topology: v6e:2x2x1
jax: 0.10.0
libtpu: 0.0.40
codegen_flags: <defaults>
</compile_context>

<pallas_src>
import functools

import jax
import jax.numpy as jnp
from jax import lax
from jax.experimental import pallas as pl
from jax.experimental.pallas import tpu as pltpu


_TWO_PI = 6.283185307179586


def _mix32(x):
    """lowbias32-style avalanche mixer on uint32 (scalar or vector)."""
    x = x ^ (x >> 16)
    x = x * jnp.uint32(0x7FEB352D)
    x = x ^ (x >> 15)
    x = x * jnp.uint32(0x846CA68B)
    x = x ^ (x >> 16)
    return x


def _bits_to_unit_float(bits):
    """uint32 bits -> f32 in [1, 2) via exponent-OR bitcast (no int->float convert)."""
    fbits = (bits >> 9) | jnp.uint32(0x3F800000)
    return lax.bitcast_convert_type(fbits, jnp.float32)


def _noise_kernel(seed_ref, x_ref, w_ref, o_ref, *, use_hw_prng):
    tb, d = x_ref.shape
    hh = tb // 2                 # tb is a multiple of 16 -> hh is 8-sublane aligned
    tile = pl.program_id(0) * pl.num_programs(1) + pl.program_id(1)

    if use_hw_prng:
        # Hardware PRNG: seed with (user seed, tile index) so every tile / core
        # draws an independent stream.  Two draws -> two uniforms per element.
        pltpu.prng_seed(seed_ref[0], tile)
        b1 = lax.bitcast_convert_type(pltpu.prng_random_bits((hh, d)), jnp.uint32)
        b2 = lax.bitcast_convert_type(pltpu.prng_random_bits((hh, d)), jnp.uint32)
    else:
        # Portable counter-based PRNG (interpret-mode-safe).  Per-tile variation
        # lives in the scalar keys; the vector path hashes a tile-local counter.
        seed = seed_ref[0].astype(jnp.uint32)
        tkey = _mix32(tile.astype(jnp.uint32) * jnp.uint32(0x9E3779B9) + jnp.uint32(1))
        k1 = _mix32(seed ^ tkey)
        k2 = _mix32((seed + jnp.uint32(0x85EBCA6B)) ^ tkey)
        row = lax.broadcasted_iota(jnp.uint32, (hh, d), 0)
        col = lax.broadcasted_iota(jnp.uint32, (hh, d), 1)
        gid = row * jnp.uint32(d) + col
        b1 = _mix32(gid ^ k1)
        b2 = _mix32(b1 ^ k2)     # keyed permutation of b1 (adequate for noise)

    # Uniforms: u1 in (0, 1] (safe log, |z| capped ~5.6 sigma), u2 in [0, 1).
    u1 = jnp.float32(2.0) - _bits_to_unit_float(b1)
    u2 = _bits_to_unit_float(b2) - jnp.float32(1.0)

    # Dual-branch Box-Muller: two standard normals per (u1, u2) pair.
    r = jnp.sqrt(jnp.float32(-2.0) * jnp.log(u1))
    theta = jnp.float32(_TWO_PI) * u2
    z_cos = r * jnp.cos(theta)
    z_sin = r * jnp.sin(theta)

    # Hoist the (1, d) -> (hh, d) weight broadcast once; reuse for both halves.
    wb = jnp.broadcast_to(w_ref[...].astype(jnp.float32), (hh, d))

    # Fused scale + add: out = x + z * weight, stored in two 8-aligned halves.
    o_ref[:hh, :] = (x_ref[:hh, :].astype(jnp.float32) + z_cos * wb).astype(o_ref.dtype)
    o_ref[hh:, :] = (x_ref[hh:, :].astype(jnp.float32) + z_sin * wb).astype(o_ref.dtype)


@functools.lru_cache(maxsize=1)
def _hw_prng_available():
    """Probe whether the TPU hardware PRNG primitives lower on this backend."""
    def probe_kernel(o_ref):
        pltpu.prng_seed(0, 1)
        o_ref[...] = lax.bitcast_convert_type(
            pltpu.prng_random_bits(o_ref.shape), jnp.uint32)

    try:
        out = pl.pallas_call(
            probe_kernel,
            out_shape=jax.ShapeDtypeStruct((8, 128), jnp.uint32),
        )()
        jax.block_until_ready(out)
        return bool(jnp.any(out != 0))
    except Exception:
        return False


def _vmem_budget_bytes():
    """Conservative per-kernel VMEM budget; larger on 128 MiB-VMEM chips."""
    try:
        cap = getattr(pltpu.get_tpu_info(), "vmem_capacity_bytes", 0)
        if cap:
            return int(min(max(cap // 5, 4 * 1024 * 1024), 24 * 1024 * 1024))
    except Exception:
        pass
    return 12 * 1024 * 1024   # safe default (v7x has 64 MiB VMEM / 32 MiB scoped)


def _round_up(n, m):
    return ((n + m - 1) // m) * m


def _pick_tiles(batch, dim, itemsize):
    # Feature tile: lane-dense (multiple of 128) when dim is large enough to
    # split; otherwise the full feature dim.  Always divides dim exactly.
    if dim >= 1024 and dim % 128 == 0:
        if dim % 512 == 0:
            tn = 512
        elif dim % 256 == 0:
            tn = 256
        else:
            tn = 128
    else:
        tn = dim
    # Row tile: multiple of 16 so the cos/sin split at tb//2 stays 8-aligned.
    # ~40 bytes per tile element covers double-buffered x/out plus the live
    # (tb/2, tn) f32 PRNG / Box-Muller temporaries.
    budget = _vmem_budget_bytes()
    bytes_per_row = max(tn * 40, 1)
    max_tb = max(16, budget // bytes_per_row)
    tb = min(1024, (max_tb // 16) * 16)
    tb = max(16, min(tb, _round_up(batch, 16)))
    return tb, tn


def noise_forward(x, weight, seed, *, donate_x=False):
    """Pallas equivalent of Noise.forward: x + randn_like(x) * weight.

    x:      (..., dim) float array
    weight: (1, dim) float array (zeros at init, like the PyTorch module)
    seed:   int; pass a fresh seed per call for fresh noise (randn_like)
    donate_x: alias the output onto x's HBM buffer (safe: elementwise).
    """
    dim = x.shape[-1]
    assert weight.shape == (1, dim), weight.shape
    orig_shape = x.shape
    x2 = x.reshape(-1, dim)
    batch = x2.shape[0]

    tb, tn = _pick_tiles(batch, dim, x2.dtype.itemsize)
    grid = (pl.cdiv(batch, tb), pl.cdiv(dim, tn))
    seed_arr = jnp.atleast_1d(jnp.asarray(seed, dtype=jnp.int32))

    kernel = functools.partial(_noise_kernel, use_hw_prng=_hw_prng_available())

    out = pl.pallas_call(
        kernel,
        out_shape=jax.ShapeDtypeStruct(x2.shape, x2.dtype),
        grid=grid,
        in_specs=[
            pl.BlockSpec(memory_space=pltpu.MemorySpace.SMEM),   # seed scalar
            pl.BlockSpec((tb, tn), lambda i, j: (i, j)),         # x tile
            pl.BlockSpec((1, tn), lambda i, j: (0, j)),          # weight tile
        ],
        out_specs=pl.BlockSpec((tb, tn), lambda i, j: (i, j)),
        compiler_params=pltpu.CompilerParams(
            dimension_semantics=("parallel", "parallel"),
            vmem_limit_bytes=32 * 1024 * 1024,
        ),
        input_output_aliases={1: 0} if donate_x else {},
    )(seed_arr, x2, weight)
    return out.reshape(orig_shape)


if __name__ == "__main__":
    key = jax.random.PRNGKey(0)
    kx, kw = jax.random.split(key)

    # Small demo: Noise(dim=128) applied to a (2, 24, 128) activation.
    b, s, dim = 2, 24, 128
    x = jax.random.normal(kx, (b, s, dim), dtype=jnp.float32)
    # PyTorch initializes weight to zeros; use a non-zero weight to exercise noise.
    weight = 0.1 * jax.random.normal(kw, (1, dim), dtype=jnp.float32)

    out = noise_forward(x, weight, seed=42)
    jax.block_until_ready(out)
    assert out.shape == x.shape and out.dtype == x.dtype

    # Module init (weight = zeros) -> output must equal x exactly.
    out_zero = noise_forward(x, jnp.zeros((1, dim), jnp.float32), seed=42)
    jax.block_until_ready(out_zero)
    assert bool(jnp.array_equal(out_zero, x))

    # Unit weight -> (out - x) should look like standard normal noise.
    z = noise_forward(x, jnp.ones((1, dim), jnp.float32), seed=7) - x
    jax.block_until_ready(z)
    assert abs(float(jnp.mean(z))) < 0.1
    assert 0.8 < float(jnp.var(z)) < 1.2

    # Different seeds -> different noise.
    z2 = noise_forward(x, jnp.ones((1, dim), jnp.float32), seed=8) - x
    assert not bool(jnp.allclose(z, z2))

    print("KERNEL_OK")
</pallas_src>

<mosaic_0001>
module attributes {stable_mosaic.version = 11 : i64} {
  func.func @_noise_kernel(%arg0: i32, %arg1: i32, %arg2: memref<1xi32, #tpu.memory_space<smem>>, %arg3: memref<48x128xf32, #tpu.memory_space<vmem>>, %arg4: memref<1x128xf32, #tpu.memory_space<vmem>>, %arg5: memref<48x128xf32, #tpu.memory_space<vmem>>) attributes {dimension_semantics = [#tpu.dimension_semantics<parallel>, #tpu.dimension_semantics<parallel>], iteration_bounds = array<i64: 1, 1>, scalar_prefetch = 0 : i64, scratch_operands = 0 : i64, tpu.core_type = #tpu.core_type<tc>, window_params = [{transform_indices = @transform_0, window_bounds = array<i64: 1>}, {transform_indices = @transform_1, window_bounds = array<i64: 48, 128>}, {transform_indices = @transform_2, window_bounds = array<i64: 1, 128>}, {transform_indices = @transform_3, window_bounds = array<i64: 48, 128>}]} {
    %c1_i32 = arith.constant 1 : i32
    %0 = arith.muli %arg0, %c1_i32 : i32
    %1 = arith.addi %0, %arg1 : i32
    %c0 = arith.constant 0 : index
    %2 = memref.load %arg2[%c0] : memref<1xi32, #tpu.memory_space<smem>>
    %c-1640531527_i32 = arith.constant -1640531527 : i32
    %3 = arith.muli %1, %c-1640531527_i32 : i32
    %c1_i32_0 = arith.constant 1 : i32
    %4 = arith.addi %3, %c1_i32_0 : i32
    %c16_i32 = arith.constant 16 : i32
    %5 = arith.shrui %4, %c16_i32 : i32
    %6 = arith.xori %4, %5 : i32
    %c2146121005_i32 = arith.constant 2146121005 : i32
    %7 = arith.muli %6, %c2146121005_i32 : i32
    %c15_i32 = arith.constant 15 : i32
    %8 = arith.shrui %7, %c15_i32 : i32
    %9 = arith.xori %7, %8 : i32
    %c-2073254261_i32 = arith.constant -2073254261 : i32
    %10 = arith.muli %9, %c-2073254261_i32 : i32
    %c16_i32_1 = arith.constant 16 : i32
    %11 = arith.shrui %10, %c16_i32_1 : i32
    %12 = arith.xori %10, %11 : i32
    %13 = arith.xori %2, %12 : i32
    %c16_i32_2 = arith.constant 16 : i32
    %14 = arith.shrui %13, %c16_i32_2 : i32
    %15 = arith.xori %13, %14 : i32
    %c2146121005_i32_3 = arith.constant 2146121005 : i32
    %16 = arith.muli %15, %c2146121005_i32_3 : i32
    %c15_i32_4 = arith.constant 15 : i32
    %17 = arith.shrui %16, %c15_i32_4 : i32
    %18 = arith.xori %16, %17 : i32
    %c-2073254261_i32_5 = arith.constant -2073254261 : i32
    %19 = arith.muli %18, %c-2073254261_i32_5 : i32
    %c16_i32_6 = arith.constant 16 : i32
    %20 = arith.shrui %19, %c16_i32_6 : i32
    %21 = arith.xori %19, %20 : i32
    %c-2048144789_i32 = arith.constant -2048144789 : i32
    %22 = arith.addi %2, %c-2048144789_i32 : i32
    %23 = arith.xori %22, %12 : i32
    %c16_i32_7 = arith.constant 16 : i32
    %24 = arith.shrui %23, %c16_i32_7 : i32
    %25 = arith.xori %23, %24 : i32
    %c2146121005_i32_8 = arith.constant 2146121005 : i32
    %26 = arith.muli %25, %c2146121005_i32_8 : i32
    %c15_i32_9 = arith.constant 15 : i32
    %27 = arith.shrui %26, %c15_i32_9 : i32
    %28 = arith.xori %26, %27 : i32
    %c-2073254261_i32_10 = arith.constant -2073254261 : i32
    %29 = arith.muli %28, %c-2073254261_i32_10 : i32
    %c16_i32_11 = arith.constant 16 : i32
    %30 = arith.shrui %29, %c16_i32_11 : i32
    %31 = arith.xori %29, %30 : i32
    %32 = tpu.iota {dimensions = array<i32: 0>} : vector<24x128xi32>
    %33 = tpu.iota {dimensions = array<i32: 1>} : vector<24x128xi32>
    %c128_i32 = arith.constant 128 : i32
    %34 = vector.broadcast %c128_i32 : i32 to vector<24x128xi32>
    %35 = arith.muli %32, %34 : vector<24x128xi32>
    %36 = arith.addi %35, %33 : vector<24x128xi32>
    %37 = vector.broadcast %21 : i32 to vector<24x128xi32>
    %38 = arith.xori %36, %37 : vector<24x128xi32>
    %c16_i32_12 = arith.constant 16 : i32
    %39 = vector.broadcast %c16_i32_12 : i32 to vector<24x128xi32>
    %40 = arith.shrui %38, %39 : vector<24x128xi32>
    %41 = arith.xori %38, %40 : vector<24x128xi32>
    %c2146121005_i32_13 = arith.constant 2146121005 : i32
    %42 = vector.broadcast %c2146121005_i32_13 : i32 to vector<24x128xi32>
    %43 = arith.muli %41, %42 : vector<24x128xi32>
    %c15_i32_14 = arith.constant 15 : i32
    %44 = vector.broadcast %c15_i32_14 : i32 to vector<24x128xi32>
    %45 = arith.shrui %43, %44 : vector<24x128xi32>
    %46 = arith.xori %43, %45 : vector<24x128xi32>
    %c-2073254261_i32_15 = arith.constant -2073254261 : i32
    %47 = vector.broadcast %c-2073254261_i32_15 : i32 to vector<24x128xi32>
    %48 = arith.muli %46, %47 : vector<24x128xi32>
    %c16_i32_16 = arith.constant 16 : i32
    %49 = vector.broadcast %c16_i32_16 : i32 to vector<24x128xi32>
    %50 = arith.shrui %48, %49 : vector<24x128xi32>
    %51 = arith.xori %48, %50 : vector<24x128xi32>
    %52 = vector.broadcast %31 : i32 to vector<24x128xi32>
    %53 = arith.xori %51, %52 : vector<24x128xi32>
    %c16_i32_17 = arith.constant 16 : i32
    %54 = vector.broadcast %c16_i32_17 : i32 to vector<24x128xi32>
    %55 = arith.shrui %53, %54 : vector<24x128xi32>
    %56 = arith.xori %53, %55 : vector<24x128xi32>
    %c2146121005_i32_18 = arith.constant 2146121005 : i32
    %57 = vector.broadcast %c2146121005_i32_18 : i32 to vector<24x128xi32>
    %58 = arith.muli %56, %57 : vector<24x128xi32>
    %c15_i32_19 = arith.constant 15 : i32
    %59 = vector.broadcast %c15_i32_19 : i32 to vector<24x128xi32>
    %60 = arith.shrui %58, %59 : vector<24x128xi32>
    %61 = arith.xori %58, %60 : vector<24x128xi32>
    %c-2073254261_i32_20 = arith.constant -2073254261 : i32
    %62 = vector.broadcast %c-2073254261_i32_20 : i32 to vector<24x128xi32>
    %63 = arith.muli %61, %62 : vector<24x128xi32>
    %c16_i32_21 = arith.constant 16 : i32
    %64 = vector.broadcast %c16_i32_21 : i32 to vector<24x128xi32>
    %65 = arith.shrui %63, %64 : vector<24x128xi32>
    %66 = arith.xori %63, %65 : vector<24x128xi32>
    %c9_i32 = arith.constant 9 : i32
    %67 = vector.broadcast %c9_i32 : i32 to vector<24x128xi32>
    %68 = arith.shrui %51, %67 : vector<24x128xi32>
    %c1065353216_i32 = arith.constant 1065353216 : i32
    %69 = vector.broadcast %c1065353216_i32 : i32 to vector<24x128xi32>
    %70 = arith.ori %68, %69 : vector<24x128xi32>
    %71 = tpu.bitcast %70 : vector<24x128xi32> -> vector<24x128xf32>
    %cst = arith.constant 2.000000e+00 : f32
    %72 = vector.broadcast %cst : f32 to vector<24x128xf32>
    %73 = arith.subf %72, %71 : vector<24x128xf32>
    %c9_i32_22 = arith.constant 9 : i32
    %74 = vector.broadcast %c9_i32_22 : i32 to vector<24x128xi32>
    %75 = arith.shrui %66, %74 : vector<24x128xi32>
    %c1065353216_i32_23 = arith.constant 1065353216 : i32
    %76 = vector.broadcast %c1065353216_i32_23 : i32 to vector<24x128xi32>
    %77 = arith.ori %75, %76 : vector<24x128xi32>
    %78 = tpu.bitcast %77 : vector<24x128xi32> -> vector<24x128xf32>
    %cst_24 = arith.constant 1.000000e+00 : f32
    %79 = vector.broadcast %cst_24 : f32 to vector<24x128xf32>
    %80 = arith.subf %78, %79 : vector<24x128xf32>
    %81 = math.log %73 : vector<24x128xf32>
    %cst_25 = arith.constant -2.000000e+00 : f32
    %82 = vector.broadcast %cst_25 : f32 to vector<24x128xf32>
    %83 = arith.mulf %82, %81 : vector<24x128xf32>
    %84 = math.sqrt %83 : vector<24x128xf32>
    %cst_26 = arith.constant 6.28318548 : f32
    %85 = vector.broadcast %cst_26 : f32 to vector<24x128xf32>
    %86 = arith.mulf %85, %80 : vector<24x128xf32>
    %87 = math.cos %86 : vector<24x128xf32>
    %88 = arith.mulf %84, %87 : vector<24x128xf32>
    %89 = math.sin %86 : vector<24x128xf32>
    %90 = arith.mulf %84, %89 : vector<24x128xf32>
    %c0_27 = arith.constant 0 : index
    %c0_28 = arith.constant 0 : index
    %91 = vector.load %arg4[%c0_27, %c0_28] : memref<1x128xf32, #tpu.memory_space<vmem>>, vector<1x128xf32>
    %92 = vector.shape_cast %91 : vector<1x128xf32> to vector<1x128xf32>
    %93 = vector.broadcast %92 : vector<1x128xf32> to vector<24x128xf32>
    %c0_29 = arith.constant 0 : index
    %c0_30 = arith.constant 0 : index
    %94 = vector.load %arg3[%c0_29, %c0_30] : memref<48x128xf32, #tpu.memory_space<vmem>>, vector<24x128xf32>
    %95 = arith.mulf %88, %93 : vector<24x128xf32>
    %96 = arith.addf %94, %95 : vector<24x128xf32>
    %c0_31 = arith.constant 0 : index
    %c0_32 = arith.constant 0 : index
    %97 = vector.load %arg5[%c0_31, %c0_32] : memref<48x128xf32, #tpu.memory_space<vmem>>, vector<24x128xf32>
    tpu.vector_store %arg5[%c0_31, %c0_32], %96 {strides = array<i32>} : memref<48x128xf32, #tpu.memory_space<vmem>>, vector<24x128xf32>,
    %c24 = arith.constant 24 : index
    %c0_33 = arith.constant 0 : index
    %98 = vector.load %arg3[%c24, %c0_33] : memref<48x128xf32, #tpu.memory_space<vmem>>, vector<24x128xf32>
    %99 = arith.mulf %90, %93 : vector<24x128xf32>
    %100 = arith.addf %98, %99 : vector<24x128xf32>
    %c24_34 = arith.constant 24 : index
    %c0_35 = arith.constant 0 : index
    %101 = vector.load %arg5[%c24_34, %c0_35] : memref<48x128xf32, #tpu.memory_space<vmem>>, vector<24x128xf32>
    tpu.vector_store %arg5[%c24_34, %c0_35], %100 {strides = array<i32>} : memref<48x128xf32, #tpu.memory_space<vmem>>, vector<24x128xf32>,
    return
  }
  func.func @transform_0(%arg0: i32, %arg1: i32) -> i32 {
    %c0_i32 = arith.constant 0 : i32
    %c0_i32_0 = arith.constant 0 : i32
    return %c0_i32 : i32
  }
  func.func @transform_1(%arg0: i32, %arg1: i32) -> (i32, i32) {
    %c0_i32 = arith.constant 0 : i32
    return %arg0, %arg1 : i32, i32
  }
  func.func @transform_2(%arg0: i32, %arg1: i32) -> (i32, i32) {
    %c0_i32 = arith.constant 0 : i32
    %c0_i32_0 = arith.constant 0 : i32
    return %c0_i32, %arg1 : i32, i32
  }
  func.func @transform_3(%arg0: i32, %arg1: i32) -> (i32, i32) {
    %c0_i32 = arith.constant 0 : i32
    return %arg0, %arg1 : i32, i32
  }
}

</mosaic_0001>

<llo_original>
// kernel: tpu_custom_call.1
$region0: #{tpu_custom_call.1}
  #allocation0 [shape = 'u32[]', space=smem, size = 0x4, offset = 0x4, fixed_abs, tag = 'smem constant byte address 0x4 - core index']
  #allocation1 [shape = 'u32[144,128]{1,0:T(1,128)}', space=vmem, size = 0x12000, scoped, tag = 'internal scratch']
  #allocation2 [shape = 's32[1]{0:T(128)S(6)}', space=smem, size = 0x200, scoped, tag = 'scoped memory for tpu_custom_call.1']
  %s0 = inlined_call_operand.<no memory space> [shape: s32[1], index: 0, kind: input, shape index: {}]
  %s1 = inlined_call_operand.hbm [shape: f32[48,128], index: 1, kind: input, shape index: {}]
  %s2 = inlined_call_operand.vmem [shape: f32[1,128], index: 2, kind: input, shape index: {}]
  %s3 = inlined_call_operand.hbm [shape: f32[48,128], index: 3, kind: output, shape index: {}]
  %s4 = sld [smem:[#allocation0]]
  $region26: #{tpu_custom_call.1} parent=0
    _
  %s6 = ssub.s32 1, %s4
  %s7 = scalar_select 0, %s6, %s4
  %8 = sst [smem:[#allocation2]] %s0
  $region1: #{tpu_custom_call.1} parent=0
    #allocation3 [shape = 'u8[24576]{0}', space=vmem, size = 0x6000, scoped, tag = 'input window, operand 1, single buffered']
    #allocation4 [shape = 's32[1]{0}', space=sflag, size = 0x4, scoped, tag = 'scoped memory for tpu_custom_call.1']
    #allocation5 [shape = 's32[1]{0}', space=sflag, size = 0x4, scoped, tag = 'scoped memory for tpu_custom_call.1']
    #allocation6 [shape = 'u8[24576]{0}', space=vmem, size = 0x6000, scoped, tag = 'output window, operand 0, single buffered']
    %9 = vsyncpa [#allocation4], 0
    %10 = vsyncpa [#allocation5], 0
    // Predicated region
    $region2: #{tpu_custom_call.1} parent=1 // pred_check
      _
    $region3: #{tpu_custom_call.1} parent=1 // pred_check_branch
      %12 = sbr.rel (0) target = $region5
    $region4: #{tpu_custom_call.1} parent=1 // pred_region
      _
    $region5: #{tpu_custom_call.1} parent=1 // pred_fallthru
      _
    // Predicated region
    $region6: #{tpu_custom_call.1} parent=1 // pred_check
      _
    $region7: #{tpu_custom_call.1} parent=1 // pred_check_branch
      %14 = sbr.rel (0) target = $region9
    $region8: #{tpu_custom_call.1} parent=1 // pred_region
      %s16 = ssub.s32 768, 768
      %17 = vsyncadd [#allocation4], %s16
      %s18 = sshll.u32 [#allocation3], 4
      %s19 = int_to_ptr.vmem [resolvable:$true] %s18
      %24 = dma.hbm_to_vmem [thread:$0]  %s1, 768, %s19, [#allocation4], 128, 128, 8
    $region9: #{tpu_custom_call.1} parent=1 // pred_fallthru
      _
    // Predicated region
    $region10: #{tpu_custom_call.1} parent=1 // pred_check
      _
    $region11: #{tpu_custom_call.1} parent=1 // pred_check_branch
      %26 = sbr.rel (0) target = $region13
    $region12: #{tpu_custom_call.1} parent=1 // pred_region
      _
    $region13: #{tpu_custom_call.1} parent=1 // pred_fallthru
      _
    // Predicated region
    $region14: #{tpu_custom_call.1} parent=1 // pred_check
      _
    $region15: #{tpu_custom_call.1} parent=1 // pred_check_branch
      %28 = sbr.rel (0) target = $region17
    $region16: #{tpu_custom_call.1} parent=1 // pred_region
      %29 = dma.done [#allocation4], 768
    $region17: #{tpu_custom_call.1} parent=1 // pred_fallthru
      _
    %s30 = sadd.s32 0, 0
    %s31 = sld [smem:[#allocation2]]
    %s32 = smul.u32 %s30, 2654435769
    %s33 = sadd.s32 %s32, 1
    %s34 = sshrl.u32 %s33, 16
    %s35 = sxor.u32 %s33, %s34
    %s36 = smul.u32 %s35, 2146121005
    %s37 = sshrl.u32 %s36, 15
    %s38 = sxor.u32 %s36, %s37
    %s39 = smul.u32 %s38, 2221713035
    %s40 = sshrl.u32 %s39, 16
    %s41 = sxor.u32 %s39, %s40
    %s42 = sxor.u32 %s31, %s41
    %s43 = sshrl.u32 %s42, 16
    %s44 = sxor.u32 %s42, %s43
    %s45 = smul.u32 %s44, 2146121005
    %s46 = sshrl.u32 %s45, 15
    %s47 = sxor.u32 %s45, %s46
    %s48 = smul.u32 %s47, 2221713035
    %s49 = sshrl.u32 %s48, 16
    %s50 = sxor.u32 %s48, %s49
    %s51 = sadd.s32 %s31, 2246822507
    %s52 = sxor.u32 %s51, %s41
    %s53 = sshrl.u32 %s52, 16
    %s54 = sxor.u32 %s52, %s53
    %s55 = smul.u32 %s54, 2146121005
    %s56 = sshrl.u32 %s55, 15
    %s57 = sxor.u32 %s55, %s56
    %s58 = smul.u32 %s57, 2221713035
    %s59 = sshrl.u32 %s58, 16
    %s60 = sxor.u32 %s58, %s59
    %v61 = vlaneseq
    %v62 = vshrl.u32 %v61, 7
    %v63 = vadd.s32 %v62, 8
    %v64 = vadd.s32 %v62, 16
    %v65 = vlaneseq
    %v66 = vand.u32 %v65, 127
    %v67 = vmul.u32 %v62, 128
    %v68 = vmul.u32 %v63, 128
    %v69 = vmul.u32 %v64, 128
    %v70 = vadd.s32 %v67, %v66
    %v71 = vadd.s32 %v68, %v66
    %v72 = vadd.s32 %v69, %v66
    %v73 = vstv %s50
    %v74 = vxor.u32 %v70, %v73
    %v75 = vxor.u32 %v71, %v73
    %v76 = vxor.u32 %v72, %v73
    %v77 = vshrl.u32 %v74, 16
    %v78 = vshrl.u32 %v75, 16
    %v79 = vshrl.u32 %v76, 16
    %v80 = vxor.u32 %v74, %v77
    %v81 = vxor.u32 %v75, %v78
    %v82 = vxor.u32 %v76, %v79
    %v83 = vmul.u32 %v80, 2146121005
    %v84 = vmul.u32 %v81, 2146121005
    %v85 = vmul.u32 %v82, 2146121005
    %v86 = vshrl.u32 %v83, 15
    %v87 = vshrl.u32 %v84, 15
    %v88 = vshrl.u32 %v85, 15
    %v89 = vxor.u32 %v83, %v86
    %v90 = vxor.u32 %v84, %v87
    %v91 = vxor.u32 %v85, %v88
    %v92 = vmul.u32 %v89, 2221713035
    %v93 = vmul.u32 %v90, 2221713035
    %v94 = vmul.u32 %v91, 2221713035
    %v95 = vshrl.u32 %v92, 16
    %v96 = vshrl.u32 %v93, 16
    %v97 = vshrl.u32 %v94, 16
    %v98 = vxor.u32 %v92, %v95
    %v99 = vxor.u32 %v93, %v96
    %v100 = vxor.u32 %v94, %v97
    %v101 = vstv %s60
    %v102 = vxor.u32 %v98, %v101
    %v103 = vxor.u32 %v99, %v101
    %v104 = vxor.u32 %v100, %v101
    %v105 = vshrl.u32 %v102, 16
    %v106 = vshrl.u32 %v103, 16
    %v107 = vshrl.u32 %v104, 16
    %v108 = vxor.u32 %v102, %v105
    %v109 = vxor.u32 %v103, %v106
    %v110 = vxor.u32 %v104, %v107
    %v111 = vmul.u32 %v108, 2146121005
    %v112 = vmul.u32 %v109, 2146121005
    %v113 = vmul.u32 %v110, 2146121005
    %v114 = vshrl.u32 %v111, 15
    %v115 = vshrl.u32 %v112, 15
    %v116 = vshrl.u32 %v113, 15
    %v117 = vxor.u32 %v111, %v114
    %v118 = vxor.u32 %v112, %v115
    %v119 = vxor.u32 %v113, %v116
    %v120 = vmul.u32 %v117, 2221713035
    %v121 = vmul.u32 %v118, 2221713035
    %v122 = vmul.u32 %v119, 2221713035
    %v123 = vshrl.u32 %v120, 16
    %v124 = vshrl.u32 %v121, 16
    %v125 = vshrl.u32 %v122, 16
    %v126 = vxor.u32 %v120, %v123
    %v127 = vxor.u32 %v121, %v124
    %v128 = vxor.u32 %v122, %v125
    %v129 = vshrl.u32 %v98, 9
    %v130 = vshrl.u32 %v99, 9
    %v131 = vshrl.u32 %v100, 9
    %v132 = vor.u32 %v129, 1065353216
    %v133 = vor.u32 %v130, 1065353216
    %v134 = vor.u32 %v131, 1065353216
    %v138 = vsub.f32 2.0, %v132
    %v139 = vsub.f32 2.0, %v133
    %v140 = vsub.f32 2.0, %v134
    %v141 = vshrl.u32 %v126, 9
    %v142 = vshrl.u32 %v127, 9
    %v143 = vshrl.u32 %v128, 9
    %v144 = vor.u32 %v141, 1065353216
    %v145 = vor.u32 %v142, 1065353216
    %v146 = vor.u32 %v143, 1065353216
    %v150 = vsub.f32 %v144, 1.0
    %v151 = vsub.f32 %v145, 1.0
    %v152 = vsub.f32 %v146, 1.0
    %v153 = vlog2.pop %v138
    %v154 = vmul.f32 %v153, 0.6931472
    %v155 = vlog2.pop %v139
    %v156 = vmul.f32 %v155, 0.6931472
    %v157 = vlog2.pop %v140
    %v158 = vmul.f32 %v157, 0.6931472
    %v159 = vmul.f32 %v154, -2.0
    %v160 = vmul.f32 %v156, -2.0
    %v161 = vmul.f32 %v158, -2.0
    %v162 = vrsqrt.pop %v159
    %v163 = vmul.f32 %v159, %v162
    %vm164 = vcmp.eq.f32.partialorder %v159, inf
    %v165 = vsel %vm164, %v159, %v163
    %vm166 = vcmp.eq.f32.partialorder %v159, 0.0
    %v167 = vand.u32 %v159, 2147483648
    %v168 = vsel %vm166, %v167, %v165
    %v169 = vrsqrt.pop %v160
    %v170 = vmul.f32 %v160, %v169
    %vm171 = vcmp.eq.f32.partialorder %v160, inf
    %v172 = vsel %vm171, %v160, %v170
    %vm173 = vcmp.eq.f32.partialorder %v160, 0.0
    %v174 = vand.u32 %v160, 2147483648
    %v175 = vsel %vm173, %v174, %v172
    %v176 = vrsqrt.pop %v161
    %v177 = vmul.f32 %v161, %v176
    %vm178 = vcmp.eq.f32.partialorder %v161, inf
    %v179 = vsel %vm178, %v161, %v177
    %vm180 = vcmp.eq.f32.partialorder %v161, 0.0
    %v181 = vand.u32 %v161, 2147483648
    %v182 = vsel %vm180, %v181, %v179
    %v183 = vmul.f32 %v150, 6.2831855
    %v184 = vmul.f32 %v151, 6.2831855
    %v185 = vmul.f32 %v152, 6.2831855
    %v186 = vand.u32 2147483647, %v183
    %vm187 = vcmp.le.f32.partialorder %v186, 0.7853982
    %vm188 = vcmp.lt.s32.totalorder %v183, 0
    %v189 = vand.u32 %v183, 2139095040
    %v190 = vshrl.u32 %v189, 23
    %v191 = vsub.s32 %v190, 127
    %v192 = vand.u32 2147483647, %v183
    %v193 = vand.u32 %v192, 8388607
    %v194 = vor.u32 %v193, 8388608
    %v195 = vsub.s32 0, %v194
    %v196 = vadd.s32 %v191, 1
    %vm197 = vcmp.gt.s32.totalorder %v196, 0
    %v198 = vsel %vm197, %v196, 0
    %v199 = vshrl.u32 %v198, 5
    %v200 = vand.u32 %v198, 31
    %v201 = vsub.s32 32, %v200
    %v202 = vshrl.u32 683565275, %v201
    %v203 = vshll.u32 683565275, %v200
    %v204 = vshrl.u32 2475754826, %v201
    %v205 = vor.u32 %v203, %v204
    %v206 = vshll.u32 2475754826, %v200
    %v207 = vshrl.u32 2131351028, %v201
    %v208 = vor.u32 %v206, %v207
    %v209 = vshll.u32 2131351028, %v200
    %v210 = vshrl.u32 2102212464, %v201
    %v211 = vor.u32 %v209, %v210
    %v212 = vshll.u32 2102212464, %v200
    %v213 = vshrl.u32 920167782, %v201
    %v214 = vor.u32 %v212, %v213
    %v215 = vshll.u32 920167782, %v200
    %v216 = vshrl.u32 1326507024, %v201
    %v217 = vor.u32 %v215, %v216
    %vm218 = vcmp.lt.s32.totalorder %v199, 1
    %vm219 = vcmp.lt.s32.totalorder %v199, 2
    %vm220 = vcmp.lt.s32.totalorder %v199, 3
    %vm221 = vcmp.lt.s32.totalorder %v199, 4
    %v222 = vsel %vm218, %v202, %v205
    %v223 = vsel %vm221, %v211, 2102212464
    %v224 = vsel %vm220, %v208, %v223
    %v225 = vsel %vm219, %v222, %v224
    %v226 = vsel %vm218, %v205, %v208
    %v227 = vsel %vm221, %v214, 920167782
    %v228 = vsel %vm220, %v211, %v227
    %v229 = vsel %vm219, %v226, %v228
    %v230 = vsel %vm218, %v208, %v211
    %v231 = vsel %vm221, %v217, 1326507024
    %v232 = vsel %vm220, %v214, %v231
    %v233 = vsel %vm219, %v230, %v232
    %v234 = vshll.u32 %v194, 8
    %v235 = vmul.u32.u64.compose %v234, %v233
    %v236 = vextract.low.u32 %v235
    %v237 = vextract.high.u32 %v235
    %v238 = vmul.u32.u64.compose %v234, %v229
    %v239 = vextract.low.u32 %v238
    %v240 = vextract.high.u32 %v238
    %v241 = vmul.u32 %v234, %v225
    %v242 = vadd.s32 %v237, %v239
    %vm243 = vc.u32 %v237, %v239
    %v244 = vadd.s32 %v240, 1
    %v245 = vsel %vm243, %v244, %v240
    %v246 = vadd.s32 %v241, %v245
    %v247 = vadd.s32 %v246, 536870912
    %v248 = vshrl.u32 %v247, 30
    %v249 = vshll.u32 %v248, 30
    %v250 = vsub.s32 %v246, %v249
    %vm251 = vcmp.lt.s32.totalorder %v250, 0
    %v252 = vsub.s32 0, %v250
    %v253 = vsel %vm251, %v252, %v250
    %v254 = vclz %v253
    %v255 = vsub.s32 %v254, 2
    %vm256 = vcmp.gt.s32.totalorder 0, %v255
    %v257 = vsel %vm256, 0, %v255
    %v258 = vsub.s32 32, %v257
    %v259 = vshll.u32 %v250, %v257
    %v260 = vshrl.u32 %v242, %v258
    %v261 = vor.u32 %v259, %v260
    %v262 = vsub.s32 4294967266, %v257
    %v263 = vadd.s32 %v262, 127
    %v264 = vshll.u32 %v263, 23
    %v265 = vor.u32 4788187, %v264
    %v266 = vand.u32 2147483647, %v265
    %v268 = vcvt.s32.f32 %v261
    %v269 = vmul.f32 %v268, %v266
    %v270 = vxor.u32 %v269, 2147483648
    %v271 = vsel %vm188, %v270, %v269
    %v272 = vsub.s32 4, %v248
    %v273 = vsel %vm188, %v272, %v248
    %v274 = vsel %vm187, %v183, %v271
    %v275 = vsel %vm187, 0, %v273
    %v276 = vcosq.f32.pop %v274
    %v277 = vsinq.f32.pop %v274
    %vm278 = vweird.f32 %v183
    %v279 = vand.u32 %v275, 3
    %vm280 = vcmp.lt.s32.totalorder %v279, 2
    %vm281 = vcmp.eq.s32.totalorder %v279, 0
    %v282 = vxor.u32 %v277, 2147483648
    %v283 = vsel %vm281, %v276, %v282
    %vm284 = vcmp.eq.s32.totalorder %v279, 2
    %v285 = vxor.u32 %v276, 2147483648
    %v286 = vsel %vm284, %v285, %v277
    %v287 = vsel %vm280, %v283, %v286
    %v288 = vsel %vm278, nan, %v287
    %v289 = vand.u32 2147483647, %v184
    %vm290 = vcmp.le.f32.partialorder %v289, 0.7853982
    %vm291 = vcmp.lt.s32.totalorder %v184, 0
    %v292 = vand.u32 %v184, 2139095040
    %v293 = vshrl.u32 %v292, 23
    %v294 = vsub.s32 %v293, 127
    %v295 = vand.u32 2147483647, %v184
    %v296 = vand.u32 %v295, 8388607
    %v297 = vor.u32 %v296, 8388608
    %v298 = vsub.s32 0, %v297
    %v299 = vadd.s32 %v294, 1
    %vm300 = vcmp.gt.s32.totalorder %v299, 0
    %v301 = vsel %vm300, %v299, 0
    %v302 = vshrl.u32 %v301, 5
    %v303 = vand.u32 %v301, 31
    %v304 = vsub.s32 32, %v303
    %v305 = vshrl.u32 683565275, %v304
    %v306 = vshll.u32 683565275, %v303
    %v307 = vshrl.u32 2475754826, %v304
    %v308 = vor.u32 %v306, %v307
    %v309 = vshll.u32 2475754826, %v303
    %v310 = vshrl.u32 2131351028, %v304
    %v311 = vor.u32 %v309, %v310
    %v312 = vshll.u32 2131351028, %v303
    %v313 = vshrl.u32 2102212464, %v304
    %v314 = vor.u32 %v312, %v313
    %v315 = vshll.u32 2102212464, %v303
    %v316 = vshrl.u32 920167782, %v304
    %v317 = vor.u32 %v315, %v316
    %v318 = vshll.u32 920167782, %v303
    %v319 = vshrl.u32 1326507024, %v304
    %v320 = vor.u32 %v318, %v319
    %vm321 = vcmp.lt.s32.totalorder %v302, 1
    %vm322 = vcmp.lt.s32.totalorder %v302, 2
    %vm323 = vcmp.lt.s32.totalorder %v302, 3
    %vm324 = vcmp.lt.s32.totalorder %v302, 4
    %v325 = vsel %vm321, %v305, %v308
    %v326 = vsel %vm324, %v314, 2102212464
    %v327 = vsel %vm323, %v311, %v326
    %v328 = vsel %vm322, %v325, %v327
    %v329 = vsel %vm321, %v308, %v311
    %v330 = vsel %vm324, %v317, 920167782
    %v331 = vsel %vm323, %v314, %v330
    %v332 = vsel %vm322, %v329, %v331
    %v333 = vsel %vm321, %v311, %v314
    %v334 = vsel %vm324, %v320, 1326507024
    %v335 = vsel %vm323, %v317, %v334
    %v336 = vsel %vm322, %v333, %v335
    %v337 = vshll.u32 %v297, 8
    %v338 = vmul.u32.u64.compose %v337, %v336
    %v339 = vextract.low.u32 %v338
    %v340 = vextract.high.u32 %v338
    %v341 = vmul.u32.u64.compose %v337, %v332
    %v342 = vextract.low.u32 %v341
    %v343 = vextract.high.u32 %v341
    %v344 = vmul.u32 %v337, %v328
    %v345 = vadd.s32 %v340, %v342
    %vm346 = vc.u32 %v340, %v342
    %v347 = vadd.s32 %v343, 1
    %v348 = vsel %vm346, %v347, %v343
    %v349 = vadd.s32 %v344, %v348
    %v350 = vadd.s32 %v349, 536870912
    %v351 = vshrl.u32 %v350, 30
    %v352 = vshll.u32 %v351, 30
    %v353 = vsub.s32 %v349, %v352
    %vm354 = vcmp.lt.s32.totalorder %v353, 0
    %v355 = vsub.s32 0, %v353
    %v356 = vsel %vm354, %v355, %v353
    %v357 = vclz %v356
    %v358 = vsub.s32 %v357, 2
    %vm359 = vcmp.gt.s32.totalorder 0, %v358
    %v360 = vsel %vm359, 0, %v358
    %v361 = vsub.s32 32, %v360
    %v362 = vshll.u32 %v353, %v360
    %v363 = vshrl.u32 %v345, %v361
    %v364 = vor.u32 %v362, %v363
    %v365 = vsub.s32 4294967266, %v360
    %v366 = vadd.s32 %v365, 127
    %v367 = vshll.u32 %v366, 23
    %v368 = vor.u32 4788187, %v367
    %v369 = vand.u32 2147483647, %v368
    %v371 = vcvt.s32.f32 %v364
    %v372 = vmul.f32 %v371, %v369
    %v373 = vxor.u32 %v372, 2147483648
    %v374 = vsel %vm291, %v373, %v372
    %v375 = vsub.s32 4, %v351
    %v376 = vsel %vm291, %v375, %v351
    %v377 = vsel %vm290, %v184, %v374
    %v378 = vsel %vm290, 0, %v376
    %v379 = vcosq.f32.pop %v377
    %v380 = vsinq.f32.pop %v377
    %vm381 = vweird.f32 %v184
    %v382 = vand.u32 %v378, 3
    %vm383 = vcmp.lt.s32.totalorder %v382, 2
    %vm384 = vcmp.eq.s32.totalorder %v382, 0
    %v385 = vxor.u32 %v380, 2147483648
    %v386 = vsel %vm384, %v379, %v385
    %vm387 = vcmp.eq.s32.totalorder %v382, 2
    %v388 = vxor.u32 %v379, 2147483648
    %v389 = vsel %vm387, %v388, %v380
    %v390 = vsel %vm383, %v386, %v389
    %v391 = vsel %vm381, nan, %v390
    %v392 = vand.u32 2147483647, %v185
    %vm393 = vcmp.le.f32.partialorder %v392, 0.7853982
    %vm394 = vcmp.lt.s32.totalorder %v185, 0
    %v395 = vand.u32 %v185, 2139095040
    %v396 = vshrl.u32 %v395, 23
    %v397 = vsub.s32 %v396, 127
    %v398 = vand.u32 2147483647, %v185
    %v399 = vand.u32 %v398, 8388607
    %v400 = vor.u32 %v399, 8388608
    %v401 = vsub.s32 0, %v400
    %v402 = vadd.s32 %v397, 1
    %vm403 = vcmp.gt.s32.totalorder %v402, 0
    %v404 = vsel %vm403, %v402, 0
    %v405 = vshrl.u32 %v404, 5
    %v406 = vand.u32 %v404, 31
    %v407 = vsub.s32 32, %v406
    %v408 = vshrl.u32 683565275, %v407
    %v409 = vshll.u32 683565275, %v406
    %v410 = vshrl.u32 2475754826, %v407
    %v411 = vor.u32 %v409, %v410
    %v412 = vshll.u32 2475754826, %v406
    %v413 = vshrl.u32 2131351028, %v407
    %v414 = vor.u32 %v412, %v413
    %v415 = vshll.u32 2131351028, %v406
    %v416 = vshrl.u32 2102212464, %v407
    %v417 = vor.u32 %v415, %v416
    %v418 = vshll.u32 2102212464, %v406
    %v419 = vshrl.u32 920167782, %v407
    %v420 = vor.u32 %v418, %v419
    %v421 = vshll.u32 920167782, %v406
    %v422 = vshrl.u32 1326507024, %v407
    %v423 = vor.u32 %v421, %v422
    %vm424 = vcmp.lt.s32.totalorder %v405, 1
    %vm425 = vcmp.lt.s32.totalorder %v405, 2
    %vm426 = vcmp.lt.s32.totalorder %v405, 3
    %vm427 = vcmp.lt.s32.totalorder %v405, 4
    %v428 = vsel %vm424, %v408, %v411
    %v429 = vsel %vm427, %v417, 2102212464
    %v430 = vsel %vm426, %v414, %v429
    %v431 = vsel %vm425, %v428, %v430
    %v432 = vsel %vm424, %v411, %v414
    %v433 = vsel %vm427, %v420, 920167782
    %v434 = vsel %vm426, %v417, %v433
    %v435 = vsel %vm425, %v432, %v434
    %v436 = vsel %vm424, %v414, %v417
    %v437 = vsel %vm427, %v423, 1326507024
    %v438 = vsel %vm426, %v420, %v437
    %v439 = vsel %vm425, %v436, %v438
    %v440 = vshll.u32 %v400, 8
    %v441 = vmul.u32.u64.compose %v440, %v439
    %v442 = vextract.low.u32 %v441
    %v443 = vextract.high.u32 %v441
    %v444 = vmul.u32.u64.compose %v440, %v435
    %v445 = vextract.low.u32 %v444
    %v446 = vextract.high.u32 %v444
    %v447 = vmul.u32 %v440, %v431
    %v448 = vadd.s32 %v443, %v445
    %vm449 = vc.u32 %v443, %v445
    %v450 = vadd.s32 %v446, 1
    %v451 = vsel %vm449, %v450, %v446
    %v452 = vadd.s32 %v447, %v451
    %v453 = vadd.s32 %v452, 536870912
    %v454 = vshrl.u32 %v453, 30
    %v455 = vshll.u32 %v454, 30
    %v456 = vsub.s32 %v452, %v455
    %vm457 = vcmp.lt.s32.totalorder %v456, 0
    %v458 = vsub.s32 0, %v456
    %v459 = vsel %vm457, %v458, %v456
    %v460 = vclz %v459
    %v461 = vsub.s32 %v460, 2
    %vm462 = vcmp.gt.s32.totalorder 0, %v461
    %v463 = vsel %vm462, 0, %v461
    %v464 = vsub.s32 32, %v463
    %v465 = vshll.u32 %v456, %v463
    %v466 = vshrl.u32 %v448, %v464
    %v467 = vor.u32 %v465, %v466
    %v468 = vsub.s32 4294967266, %v463
    %v469 = vadd.s32 %v468, 127
    %v470 = vshll.u32 %v469, 23
    %v471 = vor.u32 4788187, %v470
    %v472 = vand.u32 2147483647, %v471
    %v474 = vcvt.s32.f32 %v467
    %v475 = vmul.f32 %v474, %v472
    %v476 = vxor.u32 %v475, 2147483648
    %v477 = vsel %vm394, %v476, %v475
    %v478 = vsub.s32 4, %v454
    %v479 = vsel %vm394, %v478, %v454
    %v480 = vsel %vm393, %v185, %v477
    %v481 = vsel %vm393, 0, %v479
    %v482 = vcosq.f32.pop %v480
    %v483 = vsinq.f32.pop %v480
    %vm484 = vweird.f32 %v185
    %v485 = vand.u32 %v481, 3
    %vm486 = vcmp.lt.s32.totalorder %v485, 2
    %vm487 = vcmp.eq.s32.totalorder %v485, 0
    %v488 = vxor.u32 %v483, 2147483648
    %v489 = vsel %vm487, %v482, %v488
    %vm490 = vcmp.eq.s32.totalorder %v485, 2
    %v491 = vxor.u32 %v482, 2147483648
    %v492 = vsel %vm490, %v491, %v483
    %v493 = vsel %vm486, %v489, %v492
    %v494 = vsel %vm484, nan, %v493
    %v495 = vmul.f32 %v168, %v288
    %v496 = vmul.f32 %v175, %v391
    %v497 = vmul.f32 %v182, %v494
    %v498 = vand.u32 2147483647, %v183
    %vm499 = vcmp.le.f32.partialorder %v498, 0.7853982
    %vm500 = vcmp.lt.s32.totalorder %v183, 0
    %v501 = vand.u32 %v183, 2139095040
    %v502 = vshrl.u32 %v501, 23
    %v503 = vsub.s32 %v502, 127
    %v504 = vand.u32 2147483647, %v183
    %v505 = vand.u32 %v504, 8388607
    %v506 = vor.u32 %v505, 8388608
    %v507 = vsub.s32 0, %v506
    %v508 = vadd.s32 %v503, 1
    %vm509 = vcmp.gt.s32.totalorder %v508, 0
    %v510 = vsel %vm509, %v508, 0
    %v511 = vshrl.u32 %v510, 5
    %v512 = vand.u32 %v510, 31
    %v513 = vsub.s32 32, %v512
    %v514 = vshrl.u32 683565275, %v513
    %v515 = vshll.u32 683565275, %v512
    %v516 = vshrl.u32 2475754826, %v513
    %v517 = vor.u32 %v515, %v516
    %v518 = vshll.u32 2475754826, %v512
    %v519 = vshrl.u32 2131351028, %v513
    %v520 = vor.u32 %v518, %v519
    %v521 = vshll.u32 2131351028, %v512
    %v522 = vshrl.u32 2102212464, %v513
    %v523 = vor.u32 %v521, %v522
    %v524 = vshll.u32 2102212464, %v512
    %v525 = vshrl.u32 920167782, %v513
    %v526 = vor.u32 %v524, %v525
    %v527 = vshll.u32 920167782, %v512
    %v528 = vshrl.u32 1326507024, %v513
    %v529 = vor.u32 %v527, %v528
    %vm530 = vcmp.lt.s32.totalorder %v511, 1
    %vm531 = vcmp.lt.s32.totalorder %v511, 2
    %vm532 = vcmp.lt.s32.totalorder %v511, 3
    %vm533 = vcmp.lt.s32.totalorder %v511, 4
    %v534 = vsel %vm530, %v514, %v517
    %v535 = vsel %vm533, %v523, 2102212464
    %v536 = vsel %vm532, %v520, %v535
    %v537 = vsel %vm531, %v534, %v536
    %v538 = vsel %vm530, %v517, %v520
    %v539 = vsel %vm533, %v526, 920167782
    %v540 = vsel %vm532, %v523, %v539
    %v541 = vsel %vm531, %v538, %v540
    %v542 = vsel %vm530, %v520, %v523
    %v543 = vsel %vm533, %v529, 1326507024
    %v544 = vsel %vm532, %v526, %v543
    %v545 = vsel %vm531, %v542, %v544
    %v546 = vshll.u32 %v506, 8
    %v547 = vmul.u32.u64.compose %v546, %v545
    %v548 = vextract.low.u32 %v547
    %v549 = vextract.high.u32 %v547
    %v550 = vmul.u32.u64.compose %v546, %v541
    %v551 = vextract.low.u32 %v550
    %v552 = vextract.high.u32 %v550
    %v553 = vmul.u32 %v546, %v537
    %v554 = vadd.s32 %v549, %v551
    %vm555 = vc.u32 %v549, %v551
    %v556 = vadd.s32 %v552, 1
    %v557 = vsel %vm555, %v556, %v552
    %v558 = vadd.s32 %v553, %v557
    %v559 = vadd.s32 %v558, 536870912
    %v560 = vshrl.u32 %v559, 30
    %v561 = vshll.u32 %v560, 30
    %v562 = vsub.s32 %v558, %v561
    %vm563 = vcmp.lt.s32.totalorder %v562, 0
    %v564 = vsub.s32 0, %v562
    %v565 = vsel %vm563, %v564, %v562
    %v566 = vclz %v565
    %v567 = vsub.s32 %v566, 2
    %vm568 = vcmp.gt.s32.totalorder 0, %v567
    %v569 = vsel %vm568, 0, %v567
    %v570 = vsub.s32 32, %v569
    %v571 = vshll.u32 %v562, %v569
    %v572 = vshrl.u32 %v554, %v570
    %v573 = vor.u32 %v571, %v572
    %v574 = vsub.s32 4294967266, %v569
    %v575 = vadd.s32 %v574, 127
    %v576 = vshll.u32 %v575, 23
    %v577 = vor.u32 4788187, %v576
    %v578 = vand.u32 2147483647, %v577
    %v580 = vcvt.s32.f32 %v573
    %v581 = vmul.f32 %v580, %v578
    %v582 = vxor.u32 %v581, 2147483648
    %v583 = vsel %vm500, %v582, %v581
    %v584 = vsub.s32 4, %v560
    %v585 = vsel %vm500, %v584, %v560
    %v586 = vsel %vm499, %v183, %v583
    %v587 = vsel %vm499, 0, %v585
    %v588 = vcosq.f32.pop %v586
    %v589 = vsinq.f32.pop %v586
    %vm590 = vweird.f32 %v183
    %v591 = vadd.s32 %v587, 3
    %v592 = vand.u32 %v591, 3
    %vm593 = vcmp.lt.s32.totalorder %v592, 2
    %vm594 = vcmp.eq.s32.totalorder %v592, 0
    %v595 = vxor.u32 %v589, 2147483648
    %v596 = vsel %vm594, %v588, %v595
    %vm597 = vcmp.eq.s32.totalorder %v592, 2
    %v598 = vxor.u32 %v588, 2147483648
    %v599 = vsel %vm597, %v598, %v589
    %v600 = vsel %vm593, %v596, %v599
    %v601 = vsel %vm590, nan, %v600
    %v602 = vand.u32 2147483647, %v184
    %vm603 = vcmp.le.f32.partialorder %v602, 0.7853982
    %vm604 = vcmp.lt.s32.totalorder %v184, 0
    %v605 = vand.u32 %v184, 2139095040
    %v606 = vshrl.u32 %v605, 23
    %v607 = vsub.s32 %v606, 127
    %v608 = vand.u32 2147483647, %v184
    %v609 = vand.u32 %v608, 8388607
    %v610 = vor.u32 %v609, 8388608
    %v611 = vsub.s32 0, %v610
    %v612 = vadd.s32 %v607, 1
    %vm613 = vcmp.gt.s32.totalorder %v612, 0
    %v614 = vsel %vm613, %v612, 0
    %v615 = vshrl.u32 %v614, 5
    %v616 = vand.u32 %v614, 31
    %v617 = vsub.s32 32, %v616
    %v618 = vshrl.u32 683565275, %v617
    %v619 = vshll.u32 683565275, %v616
    %v620 = vshrl.u32 2475754826, %v617
    %v621 = vor.u32 %v619, %v620
    %v622 = vshll.u32 2475754826, %v616
    %v623 = vshrl.u32 2131351028, %v617
    %v624 = vor.u32 %v622, %v623
    %v625 = vshll.u32 2131351028, %v616
    %v626 = vshrl.u32 2102212464, %v617
    %v627 = vor.u32 %v625, %v626
    %v628 = vshll.u32 2102212464, %v616
    %v629 = vshrl.u32 920167782, %v617
    %v630 = vor.u32 %v628, %v629
    %v631 = vshll.u32 920167782, %v616
    %v632 = vshrl.u32 1326507024, %v617
    %v633 = vor.u32 %v631, %v632
    %vm634 = vcmp.lt.s32.totalorder %v615, 1
    %vm635 = vcmp.lt.s32.totalorder %v615, 2
    %vm636 = vcmp.lt.s32.totalorder %v615, 3
    %vm637 = vcmp.lt.s32.totalorder %v615, 4
    %v638 = vsel %vm634, %v618, %v621
    %v639 = vsel %vm637, %v627, 2102212464
    %v640 = vsel %vm636, %v624, %v639
    %v641 = vsel %vm635, %v638, %v640
    %v642 = vsel %vm634, %v621, %v624
    %v643 = vsel %vm637, %v630, 920167782
    %v644 = vsel %vm636, %v627, %v643
    %v645 = vsel %vm635, %v642, %v644
    %v646 = vsel %vm634, %v624, %v627
    %v647 = vsel %vm637, %v633, 1326507024
    %v648 = vsel %vm636, %v630, %v647
    %v649 = vsel %vm635, %v646, %v648
    %v650 = vshll.u32 %v610, 8
    %v651 = vmul.u32.u64.compose %v650, %v649
    %v652 = vextract.low.u32 %v651
    %v653 = vextract.high.u32 %v651
    %v654 = vmul.u32.u64.compose %v650, %v645
    %v655 = vextract.low.u32 %v654
    %v656 = vextract.high.u32 %v654
    %v657 = vmul.u32 %v650, %v641
    %v658 = vadd.s32 %v653, %v655
    %vm659 = vc.u32 %v653, %v655
    %v660 = vadd.s32 %v656, 1
    %v661 = vsel %vm659, %v660, %v656
    %v662 = vadd.s32 %v657, %v661
    %v663 = vadd.s32 %v662, 536870912
    %v664 = vshrl.u32 %v663, 30
    %v665 = vshll.u32 %v664, 30
    %v666 = vsub.s32 %v662, %v665
    %vm667 = vcmp.lt.s32.totalorder %v666, 0
    %v668 = vsub.s32 0, %v666
    %v669 = vsel %vm667, %v668, %v666
    %v670 = vclz %v669
    %v671 = vsub.s32 %v670, 2
    %vm672 = vcmp.gt.s32.totalorder 0, %v671
    %v673 = vsel %vm672, 0, %v671
    %v674 = vsub.s32 32, %v673
    %v675 = vshll.u32 %v666, %v673
    %v676 = vshrl.u32 %v658, %v674
    %v677 = vor.u32 %v675, %v676
    %v678 = vsub.s32 4294967266, %v673
    %v679 = vadd.s32 %v678, 127
    %v680 = vshll.u32 %v679, 23
    %v681 = vor.u32 4788187, %v680
    %v682 = vand.u32 2147483647, %v681
    %v684 = vcvt.s32.f32 %v677
    %v685 = vmul.f32 %v684, %v682
    %v686 = vxor.u32 %v685, 2147483648
    %v687 = vsel %vm604, %v686, %v685
    %v688 = vsub.s32 4, %v664
    %v689 = vsel %vm604, %v688, %v664
    %v690 = vsel %vm603, %v184, %v687
    %v691 = vsel %vm603, 0, %v689
    %v692 = vcosq.f32.pop %v690
    %v693 = vsinq.f32.pop %v690
    %vm694 = vweird.f32 %v184
    %v695 = vadd.s32 %v691, 3
    %v696 = vand.u32 %v695, 3
    %vm697 = vcmp.lt.s32.totalorder %v696, 2
    %vm698 = vcmp.eq.s32.totalorder %v696, 0
    %v699 = vxor.u32 %v693, 2147483648
    %v700 = vsel %vm698, %v692, %v699
    %vm701 = vcmp.eq.s32.totalorder %v696, 2
    %v702 = vxor.u32 %v692, 2147483648
    %v703 = vsel %vm701, %v702, %v693
    %v704 = vsel %vm697, %v700, %v703
    %v705 = vsel %vm694, nan, %v704
    %v706 = vand.u32 2147483647, %v185
    %vm707 = vcmp.le.f32.partialorder %v706, 0.7853982
    %vm708 = vcmp.lt.s32.totalorder %v185, 0
    %v709 = vand.u32 %v185, 2139095040
    %v710 = vshrl.u32 %v709, 23
    %v711 = vsub.s32 %v710, 127
    %v712 = vand.u32 2147483647, %v185
    %v713 = vand.u32 %v712, 8388607
    %v714 = vor.u32 %v713, 8388608
    %v715 = vsub.s32 0, %v714
    %v716 = vadd.s32 %v711, 1
    %vm717 = vcmp.gt.s32.totalorder %v716, 0
    %v718 = vsel %vm717, %v716, 0
    %v719 = vshrl.u32 %v718, 5
    %v720 = vand.u32 %v718, 31
    %v721 = vsub.s32 32, %v720
    %v722 = vshrl.u32 683565275, %v721
    %v723 = vshll.u32 683565275, %v720
    %v724 = vshrl.u32 2475754826, %v721
    %v725 = vor.u32 %v723, %v724
    %v726 = vshll.u32 2475754826, %v720
    %v727 = vshrl.u32 2131351028, %v721
    %v728 = vor.u32 %v726, %v727
    %v729 = vshll.u32 2131351028, %v720
    %v730 = vshrl.u32 2102212464, %v721
    %v731 = vor.u32 %v729, %v730
    %v732 = vshll.u32 2102212464, %v720
    %v733 = vshrl.u32 920167782, %v721
    %v734 = vor.u32 %v732, %v733
    %v735 = vshll.u32 920167782, %v720
    %v736 = vshrl.u32 1326507024, %v721
    %v737 = vor.u32 %v735, %v736
    %vm738 = vcmp.lt.s32.totalorder %v719, 1
    %vm739 = vcmp.lt.s32.totalorder %v719, 2
    %vm740 = vcmp.lt.s32.totalorder %v719, 3
    %vm741 = vcmp.lt.s32.totalorder %v719, 4
    %v742 = vsel %vm738, %v722, %v725
    %v743 = vsel %vm741, %v731, 2102212464
    %v744 = vsel %vm740, %v728, %v743
    %v745 = vsel %vm739, %v742, %v744
    %v746 = vsel %vm738, %v725, %v728
    %v747 = vsel %vm741, %v734, 920167782
    %v748 = vsel %vm740, %v731, %v747
    %v749 = vsel %vm739, %v746, %v748
    %v750 = vsel %vm738, %v728, %v731
    %v751 = vsel %vm741, %v737, 1326507024
    %v752 = vsel %vm740, %v734, %v751
    %v753 = vsel %vm739, %v750, %v752
    %v754 = vshll.u32 %v714, 8
    %v755 = vmul.u32.u64.compose %v754, %v753
    %v756 = vextract.low.u32 %v755
    %v757 = vextract.high.u32 %v755
    %v758 = vmul.u32.u64.compose %v754, %v749
    %v759 = vextract.low.u32 %v758
    %v760 = vextract.high.u32 %v758
    %v761 = vmul.u32 %v754, %v745
    %v762 = vadd.s32 %v757, %v759
    %vm763 = vc.u32 %v757, %v759
    %v764 = vadd.s32 %v760, 1
    %v765 = vsel %vm763, %v764, %v760
    %v766 = vadd.s32 %v761, %v765
    %v767 = vadd.s32 %v766, 536870912
    %v768 = vshrl.u32 %v767, 30
    %v769 = vshll.u32 %v768, 30
    %v770 = vsub.s32 %v766, %v769
    %vm771 = vcmp.lt.s32.totalorder %v770, 0
    %v772 = vsub.s32 0, %v770
    %v773 = vsel %vm771, %v772, %v770
    %v774 = vclz %v773
    %v775 = vsub.s32 %v774, 2
    %vm776 = vcmp.gt.s32.totalorder 0, %v775
    %v777 = vsel %vm776, 0, %v775
    %v778 = vsub.s32 32, %v777
    %v779 = vshll.u32 %v770, %v777
    %v780 = vshrl.u32 %v762, %v778
    %v781 = vor.u32 %v779, %v780
    %v782 = vsub.s32 4294967266, %v777
    %v783 = vadd.s32 %v782, 127
    %v784 = vshll.u32 %v783, 23
    %v785 = vor.u32 4788187, %v784
    %v786 = vand.u32 2147483647, %v785
    %v788 = vcvt.s32.f32 %v781
    %v789 = vmul.f32 %v788, %v786
    %v790 = vxor.u32 %v789, 2147483648
    %v791 = vsel %vm708, %v790, %v789
    %v792 = vsub.s32 4, %v768
    %v793 = vsel %vm708, %v792, %v768
    %v794 = vsel %vm707, %v185, %v791
    %v795 = vsel %vm707, 0, %v793
    %v796 = vcosq.f32.pop %v794
    %v797 = vsinq.f32.pop %v794
    %vm798 = vweird.f32 %v185
    %v799 = vadd.s32 %v795, 3
    %v800 = vand.u32 %v799, 3
    %vm801 = vcmp.lt.s32.totalorder %v800, 2
    %vm802 = vcmp.eq.s32.totalorder %v800, 0
    %v803 = vxor.u32 %v797, 2147483648
    %v804 = vsel %vm802, %v796, %v803
    %vm805 = vcmp.eq.s32.totalorder %v800, 2
    %v806 = vxor.u32 %v796, 2147483648
    %v807 = vsel %vm805, %v806, %v797
    %v808 = vsel %vm801, %v804, %v807
    %v809 = vsel %vm798, nan, %v808
    %v810 = vmul.f32 %v168, %v601
    %v811 = vmul.f32 %v175, %v705
    %v812 = vmul.f32 %v182, %v809
    %v813 = vld [vmem:[%s2] sm:$0x1]
    %v815 = vlaneseq
    %v816 = vshrl.u32 %v815, 7
    %v817 = vsub.s32 0, %v816
    %v818 = vrot.slane %v813, %v817
    %v820 = vld [vmem:[#allocation3] sm:$0xff]
    %v821 = vld [vmem:[#allocation3 + $0x8] sm:$0xff]
    %v822 = vld [vmem:[#allocation3 + $0x10] sm:$0xff]
    %v823 = vmul.f32 %v495, %v818
    %v824 = vmul.f32 %v496, %v818
    %v825 = vmul.f32 %v497, %v818
    %v826 = vadd.f32 %v820, %v823
    %v827 = vadd.f32 %v821, %v824
    %v828 = vadd.f32 %v822, %v825
    %829 = vst [vmem:[#allocation6] sm:$0xff] %v826
    %830 = vst [vmem:[#allocation6 + $0x8] sm:$0xff] %v827
    %831 = vst [vmem:[#allocation6 + $0x10] sm:$0xff] %v828
    %v832 = vld [vmem:[#allocation3 + $0x18] sm:$0xff]
    %v833 = vld [vmem:[#allocation3 + $0x20] sm:$0xff]
    %v834 = vld [vmem:[#allocation3 + $0x28] sm:$0xff]
    %v835 = vmul.f32 %v810, %v818
    %v836 = vmul.f32 %v811, %v818
    %v837 = vmul.f32 %v812, %v818
    %v838 = vadd.f32 %v832, %v835
    %v839 = vadd.f32 %v833, %v836
    %v840 = vadd.f32 %v834, %v837
    %841 = vst [vmem:[#allocation6 + $0x18] sm:$0xff] %v838
    %842 = vst [vmem:[#allocation6 + $0x20] sm:$0xff] %v839
    %843 = vst [vmem:[#allocation6 + $0x28] sm:$0xff] %v840
    // Predicated region
    $region18: #{tpu_custom_call.1} parent=1 // pred_check
      _
    $region19: #{tpu_custom_call.1} parent=1 // pred_check_branch
      %845 = sbr.rel (0) target = $region21
    $region20: #{tpu_custom_call.1} parent=1 // pred_region
      %s847 = ssub.s32 768, 768
      %848 = vsyncadd [#allocation5], %s847
      %s849 = sshll.u32 [#allocation6], 4
      %s850 = int_to_ptr.vmem [resolvable:$true] %s849
      %855 = dma.vmem_to_hbm [thread:$0]  %s850, 768, %s3, [#allocation5], 128, 128, 8
    $region21: #{tpu_custom_call.1} parent=1 // pred_fallthru
      _
    // Predicated region
    $region22: #{tpu_custom_call.1} parent=1 // pred_check
      _
    $region23: #{tpu_custom_call.1} parent=1 // pred_check_branch
      %857 = sbr.rel (0) target = $region25
    $region24: #{tpu_custom_call.1} parent=1 // pred_region
      %858 = dma.done [#allocation5], 768
    $region25: #{tpu_custom_call.1} parent=1 // pred_fallthru
      _
    %859 = vsyncpa [#allocation4], 1
    %860 = vsyncpa [#allocation5], 1

</llo_original>
